<compile_context>
chip_gen: v6e
topology: v6e:2x2x1
jax: 0.10.0
libtpu: 0.0.40
codegen_flags: <defaults>
</compile_context>

<pallas_src>
import functools

import jax
import jax.numpy as jnp
from jax.experimental import pallas as pl
from jax.experimental.pallas import tpu as pltpu


def _round_up(x, m):
    return ((x + m - 1) // m) * m


# Static bf16 weight-stack budget (bytes) under which the whole stack is kept
# resident in VMEM (conservative for v5e's 16 MiB default scoped VMEM, since
# BlockSpec double-buffers the block even when its index never changes).
_RESIDENT_WEIGHT_BUDGET = 6 * 1024 * 1024


# -----------------------------------------------------------------------------
# Path A: weight stack resident in VMEM, layers statically unrolled.
# -----------------------------------------------------------------------------
def _linstack_resident_kernel(x_ref, w_ref, b_ref, o_ref, *,
                              act_bool: bool, num_layers: int):
    """One grid step = all layers applied to one batch tile.

    x_ref : (TB, Dp)     f32   -- padded input tile
    w_ref : (L, Dp, Dp)  bf16  -- full padded weight stack (VMEM-resident)
    b_ref : (L, 1, Dp)   f32   -- full padded bias stack
    o_ref : (TB, Dp)     f32   -- padded output tile
    """
    a = x_ref[...].astype(jnp.float32)
    for l in range(num_layers):                       # static unroll
        if act_bool:
            a = jnp.maximum(a, 0.0)                   # ReLU on the VPU
        a = jnp.dot(a.astype(jnp.bfloat16), w_ref[l],  # bf16 MXU, f32 accum
                    preferred_element_type=jnp.float32) + b_ref[l]
    o_ref[...] = a.astype(o_ref.dtype)
    # dropout (eval mode) == identity


# -----------------------------------------------------------------------------
# Path B: layer axis on the grid, weights streamed; activation VMEM-resident.
# -----------------------------------------------------------------------------
def _linstack_pipelined_kernel(x_ref, w_ref, b_ref, o_ref, act_ref, *,
                               act_bool: bool):
    """One grid step = one layer applied to one batch tile.

    x_ref  : (TB, Dp)  f32   -- padded input (same block every layer step)
    w_ref  : (Dp, Dp)  bf16  -- padded weight of layer `l` (layer dim squeezed)
    b_ref  : (1, Dp)   f32   -- padded bias of layer `l`
    o_ref  : (TB, Dp)  f32   -- written only on the last layer
    act_ref: (TB, Dp)  f32   -- VMEM-resident activation carried across layers
    """
    layer = pl.program_id(1)
    last = pl.num_programs(1) - 1

    @pl.when(layer == 0)
    def _():
        act_ref[...] = x_ref[...].astype(jnp.float32)

    a = act_ref[...]
    if act_bool:
        a = jnp.maximum(a, 0.0)
    out = jnp.dot(a.astype(jnp.bfloat16), w_ref[...],
                  preferred_element_type=jnp.float32) + b_ref[...]

    @pl.when(layer < last)
    def _():
        act_ref[...] = out

    @pl.when(layer == last)
    def _():
        o_ref[...] = out.astype(o_ref.dtype)


@functools.partial(jax.jit,
                   static_argnames=("act_bool", "out_dim", "force_pipelined"))
def _linstack_forward(x, w_stack, b_stack, *, act_bool: bool, out_dim: int,
                      force_pipelined: bool = False):
    B, Din = x.shape
    L, Dp, _ = w_stack.shape

    # Batch tiling: one tile for small batches, 256-row tiles for large ones.
    tile_b = min(_round_up(B, 8), 256)
    Bp = _round_up(B, tile_b)

    # Zero-pad input to (Bp, Dp); zeros propagate exactly through ReLU/matmul.
    x_pad = jnp.zeros((Bp, Dp), jnp.float32).at[:B, :Din].set(
        x.astype(jnp.float32))

    weight_bytes = (w_stack.size * w_stack.dtype.itemsize
                    + b_stack.size * b_stack.dtype.itemsize)
    use_resident = (not force_pipelined) and (weight_bytes
                                              <= _RESIDENT_WEIGHT_BUDGET)

    if use_resident:
        kernel = functools.partial(_linstack_resident_kernel,
                                   act_bool=act_bool, num_layers=L)
        out_pad = pl.pallas_call(
            kernel,
            out_shape=jax.ShapeDtypeStruct((Bp, Dp), jnp.float32),
            grid_spec=pltpu.PrefetchScalarGridSpec(
                num_scalar_prefetch=0,
                grid=(Bp // tile_b,),                  # batch tiles only
                in_specs=[
                    pl.BlockSpec((tile_b, Dp), lambda b: (b, 0)),
                    # constant block index -> weight stack DMA'd once, resident
                    pl.BlockSpec((L, Dp, Dp), lambda b: (0, 0, 0)),
                    pl.BlockSpec((L, 1, Dp), lambda b: (0, 0, 0)),
                ],
                out_specs=pl.BlockSpec((tile_b, Dp), lambda b: (b, 0)),
            ),
            compiler_params=pltpu.CompilerParams(
                dimension_semantics=("parallel",)),
        )(x_pad, w_stack, b_stack)
    else:
        kernel = functools.partial(_linstack_pipelined_kernel,
                                   act_bool=act_bool)
        out_pad = pl.pallas_call(
            kernel,
            out_shape=jax.ShapeDtypeStruct((Bp, Dp), jnp.float32),
            grid_spec=pltpu.PrefetchScalarGridSpec(
                num_scalar_prefetch=0,
                grid=(Bp // tile_b, L),                # (batch tiles, layers)
                in_specs=[
                    # same x block for every layer step -> fetched once / tile
                    pl.BlockSpec((tile_b, Dp), lambda b, l: (b, 0)),
                    # layer-indexed weight slab, auto-pipelined over layer axis
                    pl.BlockSpec((None, Dp, Dp), lambda b, l: (l, 0, 0)),
                    # layer-indexed bias
                    pl.BlockSpec((None, 1, Dp), lambda b, l: (l, 0, 0)),
                ],
                out_specs=pl.BlockSpec((tile_b, Dp), lambda b, l: (b, 0)),
                scratch_shapes=[pltpu.VMEM((tile_b, Dp), jnp.float32)],
            ),
            compiler_params=pltpu.CompilerParams(
                dimension_semantics=("parallel", "arbitrary")),
        )(x_pad, w_stack, b_stack)

    return out_pad[:B, :out_dim]


class LinStackPallas:
    """Pallas port of linStack. Parameters are built deterministically."""

    def __init__(self, num_layers, in_dim, hidden_dim, out_dim, bias, actBool,
                 dp, key=jax.random.PRNGKey(0), dtype=jnp.float32):
        self.actBool = bool(actBool)
        self.dp = dp  # eval-mode dropout is identity
        self.out_dim = out_dim

        Dp = _round_up(max(in_dim, hidden_dim, out_dim), 128)
        self.Dp = Dp

        self.raw_weights = []   # [in, out] f32 (for the reference)
        self.raw_biases = []
        w_padded, b_padded = [], []
        for i in range(num_layers):
            d_in = hidden_dim if i > 0 else in_dim
            d_out = hidden_dim if i < num_layers - 1 else out_dim
            key, kw, kb = jax.random.split(key, 3)
            bound = float(d_in) ** -0.5
            # stored as [in, out] (transpose of torch's Linear.weight [out, in])
            w = jax.random.uniform(kw, (d_in, d_out), dtype, -bound, bound)
            if bias:
                bvec = jax.random.uniform(kb, (d_out,), dtype, -bound, bound)
            else:
                bvec = jnp.zeros((d_out,), dtype)
            self.raw_weights.append(w)
            self.raw_biases.append(bvec)

            wp = jnp.zeros((Dp, Dp), jnp.bfloat16).at[:d_in, :d_out].set(
                w.astype(jnp.bfloat16))
            bp = jnp.zeros((1, Dp), jnp.float32).at[0, :d_out].set(
                bvec.astype(jnp.float32))
            w_padded.append(wp)
            b_padded.append(bp)

        self.w_stack = jnp.stack(w_padded)   # (L, Dp, Dp) bf16
        self.b_stack = jnp.stack(b_padded)   # (L, 1, Dp)  f32

    def __call__(self, x, force_pipelined=False):
        return _linstack_forward(x, self.w_stack, self.b_stack,
                                 act_bool=self.actBool, out_dim=self.out_dim,
                                 force_pipelined=force_pipelined)


def _reference(model, x):
    """Pure-JAX reference with identical numerics (bf16 weights, f32 accum)."""
    x = x.astype(jnp.float32)
    for w, b in zip(model.raw_weights, model.raw_biases):
        if model.actBool:
            x = jnp.maximum(x, 0.0)
        x = jnp.dot(x.astype(jnp.bfloat16), w.astype(jnp.bfloat16),
                    preferred_element_type=jnp.float32) + b.astype(jnp.float32)
    return x


if __name__ == "__main__":
    key = jax.random.PRNGKey(0)
    k_in, k_param = jax.random.split(key)

    batch = 8
    num_layers = 3
    in_dim = 32
    hidden_dim = 64
    out_dim = 16

    model = LinStackPallas(
        num_layers=num_layers,
        in_dim=in_dim,
        hidden_dim=hidden_dim,
        out_dim=out_dim,
        bias=True,
        actBool=True,
        dp=0.0,
        key=k_param,
    )

    x = jax.random.normal(k_in, (batch, in_dim), jnp.float32)
    ref = _reference(model, x)

    # Path A: VMEM-resident weight stack, layers unrolled (default here).
    out_a = jax.block_until_ready(model(x))
    assert out_a.shape == (batch, out_dim)
    assert jnp.allclose(out_a, ref, atol=2e-3, rtol=2e-3), (
        float(jnp.max(jnp.abs(out_a - ref))))

    # Path B: layer-grid pipelined fallback (used when weights exceed VMEM).
    out_b = jax.block_until_ready(model(x, force_pipelined=True))
    assert out_b.shape == (batch, out_dim)
    assert jnp.allclose(out_b, ref, atol=2e-3, rtol=2e-3), (
        float(jnp.max(jnp.abs(out_b - ref))))

    print("KERNEL_OK")
</pallas_src>

<mosaic_0001>
module attributes {stable_mosaic.version = 11 : i64} {
  func.func @_linstack_resident_kernel(%arg0: i32, %arg1: memref<8x128xf32, #tpu.memory_space<vmem>>, %arg2: memref<3x128x128xbf16, #tpu.memory_space<vmem>>, %arg3: memref<3x1x128xf32, #tpu.memory_space<vmem>>, %arg4: memref<8x128xf32, #tpu.memory_space<vmem>>) attributes {dimension_semantics = [#tpu.dimension_semantics<parallel>], iteration_bounds = array<i64: 1>, scalar_prefetch = 0 : i64, scratch_operands = 0 : i64, tpu.core_type = #tpu.core_type<tc>, window_params = [{transform_indices = @transform_0, window_bounds = array<i64: 8, 128>}, {pipeline_mode = #tpu.pipeline_mode<synchronous>, transform_indices = @transform_1, window_bounds = array<i64: 3, 128, 128>}, {pipeline_mode = #tpu.pipeline_mode<synchronous>, transform_indices = @transform_2, window_bounds = array<i64: 3, 1, 128>}, {transform_indices = @transform_3, window_bounds = array<i64: 8, 128>}]} {
    %c0 = arith.constant 0 : index
    %c0_0 = arith.constant 0 : index
    %0 = vector.load %arg1[%c0, %c0_0] : memref<8x128xf32, #tpu.memory_space<vmem>>, vector<8x128xf32>
    %cst = arith.constant 0.000000e+00 : f32
    %1 = vector.broadcast %cst : f32 to vector<8x128xf32>
    %2 = arith.maximumf %0, %1 : vector<8x128xf32>
    %3 = arith.truncf %2 : vector<8x128xf32> to vector<8x128xbf16>
    %c0_1 = arith.constant 0 : index
    %c0_2 = arith.constant 0 : index
    %c0_3 = arith.constant 0 : index
    %4 = vector.load %arg2[%c0_1, %c0_2, %c0_3] : memref<3x128x128xbf16, #tpu.memory_space<vmem>>, vector<1x128x128xbf16>
    %5 = vector.shape_cast %4 : vector<1x128x128xbf16> to vector<128x128xbf16>
    %cst_4 = arith.constant dense<0.000000e+00> : vector<8x128xf32>
    %6 = tpu.matmul %3, %5, %cst_4 {dimension_numbers = #tpu.dot_dimension_numbers<[1], [0], [0], [1], [0, 0, 1, 1], [], []>} : vector<8x128xbf16>, vector<128x128xbf16>, vector<8x128xf32> -> vector<8x128xf32>
    %c0_5 = arith.constant 0 : index
    %c0_6 = arith.constant 0 : index
    %c0_7 = arith.constant 0 : index
    %7 = vector.load %arg3[%c0_5, %c0_6, %c0_7] : memref<3x1x128xf32, #tpu.memory_space<vmem>>, vector<1x1x128xf32>
    %8 = vector.shape_cast %7 : vector<1x1x128xf32> to vector<1x128xf32>
    %9 = vector.broadcast %8 : vector<1x128xf32> to vector<8x128xf32>
    %10 = arith.addf %6, %9 : vector<8x128xf32>
    %cst_8 = arith.constant 0.000000e+00 : f32
    %11 = vector.broadcast %cst_8 : f32 to vector<8x128xf32>
    %12 = arith.maximumf %10, %11 : vector<8x128xf32>
    %13 = arith.truncf %12 : vector<8x128xf32> to vector<8x128xbf16>
    %c1 = arith.constant 1 : index
    %c0_9 = arith.constant 0 : index
    %c0_10 = arith.constant 0 : index
    %14 = vector.load %arg2[%c1, %c0_9, %c0_10] : memref<3x128x128xbf16, #tpu.memory_space<vmem>>, vector<1x128x128xbf16>
    %15 = vector.shape_cast %14 : vector<1x128x128xbf16> to vector<128x128xbf16>
    %cst_11 = arith.constant dense<0.000000e+00> : vector<8x128xf32>
    %16 = tpu.matmul %13, %15, %cst_11 {dimension_numbers = #tpu.dot_dimension_numbers<[1], [0], [0], [1], [0, 0, 1, 1], [], []>} : vector<8x128xbf16>, vector<128x128xbf16>, vector<8x128xf32> -> vector<8x128xf32>
    %c1_12 = arith.constant 1 : index
    %c0_13 = arith.constant 0 : index
    %c0_14 = arith.constant 0 : index
    %17 = vector.load %arg3[%c1_12, %c0_13, %c0_14] : memref<3x1x128xf32, #tpu.memory_space<vmem>>, vector<1x1x128xf32>
    %18 = vector.shape_cast %17 : vector<1x1x128xf32> to vector<1x128xf32>
    %19 = vector.broadcast %18 : vector<1x128xf32> to vector<8x128xf32>
    %20 = arith.addf %16, %19 : vector<8x128xf32>
    %cst_15 = arith.constant 0.000000e+00 : f32
    %21 = vector.broadcast %cst_15 : f32 to vector<8x128xf32>
    %22 = arith.maximumf %20, %21 : vector<8x128xf32>
    %23 = arith.truncf %22 : vector<8x128xf32> to vector<8x128xbf16>
    %c2 = arith.constant 2 : index
    %c0_16 = arith.constant 0 : index
    %c0_17 = arith.constant 0 : index
    %24 = vector.load %arg2[%c2, %c0_16, %c0_17] : memref<3x128x128xbf16, #tpu.memory_space<vmem>>, vector<1x128x128xbf16>
    %25 = vector.shape_cast %24 : vector<1x128x128xbf16> to vector<128x128xbf16>
    %cst_18 = arith.constant dense<0.000000e+00> : vector<8x128xf32>
    %26 = tpu.matmul %23, %25, %cst_18 {dimension_numbers = #tpu.dot_dimension_numbers<[1], [0], [0], [1], [0, 0, 1, 1], [], []>} : vector<8x128xbf16>, vector<128x128xbf16>, vector<8x128xf32> -> vector<8x128xf32>
    %c2_19 = arith.constant 2 : index
    %c0_20 = arith.constant 0 : index
    %c0_21 = arith.constant 0 : index
    %27 = vector.load %arg3[%c2_19, %c0_20, %c0_21] : memref<3x1x128xf32, #tpu.memory_space<vmem>>, vector<1x1x128xf32>
    %28 = vector.shape_cast %27 : vector<1x1x128xf32> to vector<1x128xf32>
    %29 = vector.broadcast %28 : vector<1x128xf32> to vector<8x128xf32>
    %30 = arith.addf %26, %29 : vector<8x128xf32>
    %c0_22 = arith.constant 0 : index
    %c0_23 = arith.constant 0 : index
    %31 = vector.load %arg4[%c0_22, %c0_23] : memref<8x128xf32, #tpu.memory_space<vmem>>, vector<8x128xf32>
    tpu.vector_store %arg4[%c0_22, %c0_23], %30 {strides = array<i32>} : memref<8x128xf32, #tpu.memory_space<vmem>>, vector<8x128xf32>,
    return
  }
  func.func @transform_0(%arg0: i32) -> (i32, i32) {
    %c0_i32 = arith.constant 0 : i32
    %c0_i32_0 = arith.constant 0 : i32
    return %arg0, %c0_i32 : i32, i32
  }
  func.func @transform_1(%arg0: i32) -> (i32, i32, i32) {
    %c0_i32 = arith.constant 0 : i32
    %c0_i32_0 = arith.constant 0 : i32
    %c0_i32_1 = arith.constant 0 : i32
    %c0_i32_2 = arith.constant 0 : i32
    return %c0_i32, %c0_i32_0, %c0_i32_1 : i32, i32, i32
  }
  func.func @transform_2(%arg0: i32) -> (i32, i32, i32) {
    %c0_i32 = arith.constant 0 : i32
    %c0_i32_0 = arith.constant 0 : i32
    %c0_i32_1 = arith.constant 0 : i32
    %c0_i32_2 = arith.constant 0 : i32
    return %c0_i32, %c0_i32_0, %c0_i32_1 : i32, i32, i32
  }
  func.func @transform_3(%arg0: i32) -> (i32, i32) {
    %c0_i32 = arith.constant 0 : i32
    %c0_i32_0 = arith.constant 0 : i32
    return %arg0, %c0_i32 : i32, i32
  }
}

</mosaic_0001>

<llo_original>
// kernel: _linstack_forward.1
$region0: #{_linstack_forward.1}
  #allocation0 [shape = 'u32[]', space=smem, size = 0x4, offset = 0x4, fixed_abs, tag = 'smem constant byte address 0x4 - core index']
  #allocation1 [shape = 'u32[144,128]{1,0:T(1,128)}', space=vmem, size = 0x12000, scoped, tag = 'internal scratch']
  %s0 = inlined_call_operand.vmem [shape: f32[8,128], index: 0, kind: input, shape index: {}]
  %s1 = inlined_call_operand.hbm [shape: bf16[3,128,128], index: 1, kind: input, shape index: {}]
  %s2 = inlined_call_operand.vmem [shape: f32[3,1,128], index: 2, kind: input, shape index: {}]
  %s3 = inlined_call_operand.hbm [shape: f32[8,128], index: 3, kind: output, shape index: {}]
  %s4 = sld [smem:[#allocation0]]
  $region26: #{_linstack_forward.1} parent=0
    _
  %s6 = ssub.s32 1, %s4
  %s7 = scalar_select 0, %s6, %s4
  $region1: #{_linstack_forward.1} parent=0
    #allocation2 [shape = 'u8[98304]{0}', space=vmem, size = 0x18000, scoped, tag = 'input window, operand 1, single buffered']
    #allocation3 [shape = 's32[1]{0}', space=sflag, size = 0x4, scoped, tag = 'scoped memory for _linstack_forward.1']
    #allocation4 [shape = 's32[1]{0}', space=sflag, size = 0x4, scoped, tag = 'scoped memory for _linstack_forward.1']
    #allocation5 [shape = 'u8[4096]{0}', space=vmem, size = 0x1000, scoped, tag = 'output window, operand 0, single buffered']
    %8 = vsyncpa [#allocation3], 0
    %9 = vsyncpa [#allocation4], 0
    // Predicated region
    $region2: #{_linstack_forward.1} parent=1 // pred_check
      _
    $region3: #{_linstack_forward.1} parent=1 // pred_check_branch
      %11 = sbr.rel (0) target = $region5
    $region4: #{_linstack_forward.1} parent=1 // pred_region
      _
    $region5: #{_linstack_forward.1} parent=1 // pred_fallthru
      _
    // Predicated region
    $region6: #{_linstack_forward.1} parent=1 // pred_check
      _
    $region7: #{_linstack_forward.1} parent=1 // pred_check_branch
      %13 = sbr.rel (0) target = $region9
    $region8: #{_linstack_forward.1} parent=1 // pred_region
      %s15 = ssub.s32 3072, 3072
      %16 = vsyncadd [#allocation3], %s15
      %s17 = sshll.u32 [#allocation2], 4
      %s18 = int_to_ptr.vmem [resolvable:$true] %s17
      %23 = dma.hbm_to_vmem [thread:$0]  %s1, 3072, %s18, [#allocation3], 64, 64, 4
    $region9: #{_linstack_forward.1} parent=1 // pred_fallthru
      _
    // Predicated region
    $region10: #{_linstack_forward.1} parent=1 // pred_check
      _
    $region11: #{_linstack_forward.1} parent=1 // pred_check_branch
      %25 = sbr.rel (0) target = $region13
    $region12: #{_linstack_forward.1} parent=1 // pred_region
      _
    $region13: #{_linstack_forward.1} parent=1 // pred_fallthru
      _
    // Predicated region
    $region14: #{_linstack_forward.1} parent=1 // pred_check
      _
    $region15: #{_linstack_forward.1} parent=1 // pred_check_branch
      %27 = sbr.rel (0) target = $region17
    $region16: #{_linstack_forward.1} parent=1 // pred_region
      %28 = dma.done [#allocation3], 3072
    $region17: #{_linstack_forward.1} parent=1 // pred_fallthru
      _
    %v30 = vld [vmem:[%s0] sm:$0xff]
    %v31 = vmax.f32 %v30, 0.0
    %v32 = vpack.c.bf16 %v31, %v31
    %v33 = vld [vmem:[#allocation2] sm:$0xf]
    %v34 = vld [vmem:[#allocation2 + $0x4] sm:$0xf]
    %v35 = vld [vmem:[#allocation2 + $0x8] sm:$0xf]
    %v36 = vld [vmem:[#allocation2 + $0xc] sm:$0xf]
    %v37 = vld [vmem:[#allocation2 + $0x10] sm:$0xf]
    %v38 = vld [vmem:[#allocation2 + $0x14] sm:$0xf]
    %v39 = vld [vmem:[#allocation2 + $0x18] sm:$0xf]
    %v40 = vld [vmem:[#allocation2 + $0x1c] sm:$0xf]
    %v41 = vld [vmem:[#allocation2 + $0x20] sm:$0xf]
    %v42 = vld [vmem:[#allocation2 + $0x24] sm:$0xf]
    %v43 = vld [vmem:[#allocation2 + $0x28] sm:$0xf]
    %v44 = vld [vmem:[#allocation2 + $0x2c] sm:$0xf]
    %v45 = vld [vmem:[#allocation2 + $0x30] sm:$0xf]
    %v46 = vld [vmem:[#allocation2 + $0x34] sm:$0xf]
    %v47 = vld [vmem:[#allocation2 + $0x38] sm:$0xf]
    %v48 = vld [vmem:[#allocation2 + $0x3c] sm:$0xf]
    %v49 = vld [vmem:[%s2] sm:$0x1]
    %v51 = vlaneseq
    %v52 = vshrl.u32 %v51, 7
    %v53 = vsub.s32 0, %v52
    %v54 = vrot.slane %v49, %v53
    %v72 = vunpack.c.l.b16 %v33
    %v73 = vunpack.c.l.b16 %v34
    %v74 = vunpack.c.l.b16 %v35
    %v75 = vunpack.c.l.b16 %v36
    %v76 = vunpack.c.l.b16 %v37
    %v77 = vunpack.c.l.b16 %v38
    %v78 = vunpack.c.l.b16 %v39
    %v79 = vunpack.c.l.b16 %v40
    %v80 = vunpack.c.l.b16 %v41
    %v81 = vunpack.c.l.b16 %v42
    %v82 = vunpack.c.l.b16 %v43
    %v83 = vunpack.c.l.b16 %v44
    %v84 = vunpack.c.l.b16 %v45
    %v85 = vunpack.c.l.b16 %v46
    %v86 = vunpack.c.l.b16 %v47
    %v87 = vunpack.c.l.b16 %v48
    %v88 = vpack.c.b16 %v73, %v72
    %v89 = vpack.c.b16 %v75, %v74
    %v90 = vpack.c.b16 %v77, %v76
    %v91 = vpack.c.b16 %v79, %v78
    %v92 = vpack.c.b16 %v81, %v80
    %v93 = vpack.c.b16 %v83, %v82
    %v94 = vpack.c.b16 %v85, %v84
    %v95 = vpack.c.b16 %v87, %v86
    %104 = vmatprep.subr.bf16.mxu0 0
    %105 = vmatpush1.bf16.msra.mxu0 %v95
    %106 = vmatprep.subr.bf16.mxu0 0
    %107 = vmatpush1.bf16.msra.mxu0 %v94
    %108 = vmatprep.subr.bf16.mxu0 0
    %109 = vmatpush1.bf16.msra.mxu0 %v93
    %110 = vmatprep.subr.bf16.mxu0 0
    %111 = vmatpush1.bf16.msra.mxu0 %v92
    %112 = vmatprep.subr.bf16.mxu0 0
    %113 = vmatpush1.bf16.msra.mxu0 %v91
    %114 = vmatprep.subr.bf16.mxu0 0
    %115 = vmatpush1.bf16.msra.mxu0 %v90
    %116 = vmatprep.subr.bf16.mxu0 0
    %117 = vmatpush1.bf16.msra.mxu0 %v89
    %118 = vmatprep.subr.bf16.mxu0 0
    %119 = vmatpush1.bf16.msra.mxu0 %v88
    %120 = vmatprep.subr.bf16.mxu0 0
    %121 = vmatpush2.bf16.msra.mxu0 0
    %122 = vmatprep.subr.bf16.mxu0 0
    %123 = vmatpush2.bf16.msra.mxu0 0
    %124 = vmatprep.subr.bf16.mxu0 0
    %125 = vmatpush2.bf16.msra.mxu0 0
    %126 = vmatprep.subr.bf16.mxu0 0
    %127 = vmatpush2.bf16.msra.mxu0 0
    %128 = vmatprep.subr.bf16.mxu0 0
    %129 = vmatpush2.bf16.msra.mxu0 0
    %130 = vmatprep.subr.bf16.mxu0 0
    %131 = vmatpush2.bf16.msra.mxu0 0
    %132 = vmatprep.subr.bf16.mxu0 0
    %133 = vmatpush2.bf16.msra.mxu0 0
    %134 = vmatprep.subr.bf16.mxu0 0
    %135 = vmatpush2.bf16.msra.mxu0 0
    %136 = vmatprep.mubr.bf16.mxu0 0
    %137 = vmatmul.mubr.bf16.gmra.mxu0 %v32
    %v138 = vpop.f32.mrf.mxu0
    %v139 = vadd.f32 %v54, %v138
    %v140 = vpop.f32.mrf.mxu0
    %v141 = vpop.f32.mrf.mxu0
    %v142 = vpop.f32.mrf.mxu0
    %143 = vdwg.mxu0
    %v144 = vmax.f32 %v139, 0.0
    %v145 = vpack.c.bf16 %v144, %v144
    %s146 = scalar_lea.vmem [#allocation2], 64
    %v147 = vld [vmem:[%s146] sm:$0xf]
    %v148 = vld [vmem:[%s146 + $0x4] sm:$0xf]
    %v149 = vld [vmem:[%s146 + $0x8] sm:$0xf]
    %v150 = vld [vmem:[%s146 + $0xc] sm:$0xf]
    %v151 = vld [vmem:[%s146 + $0x10] sm:$0xf]
    %v152 = vld [vmem:[%s146 + $0x14] sm:$0xf]
    %v153 = vld [vmem:[%s146 + $0x18] sm:$0xf]
    %v154 = vld [vmem:[%s146 + $0x1c] sm:$0xf]
    %v155 = vld [vmem:[%s146 + $0x20] sm:$0xf]
    %v156 = vld [vmem:[%s146 + $0x24] sm:$0xf]
    %v157 = vld [vmem:[%s146 + $0x28] sm:$0xf]
    %v158 = vld [vmem:[%s146 + $0x2c] sm:$0xf]
    %v159 = vld [vmem:[%s146 + $0x30] sm:$0xf]
    %v160 = vld [vmem:[%s146 + $0x34] sm:$0xf]
    %v161 = vld [vmem:[%s146 + $0x38] sm:$0xf]
    %v162 = vld [vmem:[%s146 + $0x3c] sm:$0xf]
    %s163 = scalar_lea.vmem %s2, 1
    %v164 = vld [vmem:[%s163] sm:$0x1]
    %v166 = vlaneseq
    %v167 = vshrl.u32 %v166, 7
    %v168 = vsub.s32 0, %v167
    %v169 = vrot.slane %v164, %v168
    %v187 = vunpack.c.l.b16 %v147
    %v188 = vunpack.c.l.b16 %v148
    %v189 = vunpack.c.l.b16 %v149
    %v190 = vunpack.c.l.b16 %v150
    %v191 = vunpack.c.l.b16 %v151
    %v192 = vunpack.c.l.b16 %v152
    %v193 = vunpack.c.l.b16 %v153
    %v194 = vunpack.c.l.b16 %v154
    %v195 = vunpack.c.l.b16 %v155
    %v196 = vunpack.c.l.b16 %v156
    %v197 = vunpack.c.l.b16 %v157
    %v198 = vunpack.c.l.b16 %v158
    %v199 = vunpack.c.l.b16 %v159
    %v200 = vunpack.c.l.b16 %v160
    %v201 = vunpack.c.l.b16 %v161
    %v202 = vunpack.c.l.b16 %v162
    %v203 = vpack.c.b16 %v188, %v187
    %v204 = vpack.c.b16 %v190, %v189
    %v205 = vpack.c.b16 %v192, %v191
    %v206 = vpack.c.b16 %v194, %v193
    %v207 = vpack.c.b16 %v196, %v195
    %v208 = vpack.c.b16 %v198, %v197
    %v209 = vpack.c.b16 %v200, %v199
    %v210 = vpack.c.b16 %v202, %v201
    %219 = vmatprep.subr.bf16.mxu0 0
    %220 = vmatpush1.bf16.msra.mxu0 %v210
    %221 = vmatprep.subr.bf16.mxu0 0
    %222 = vmatpush1.bf16.msra.mxu0 %v209
    %223 = vmatprep.subr.bf16.mxu0 0
    %224 = vmatpush1.bf16.msra.mxu0 %v208
    %225 = vmatprep.subr.bf16.mxu0 0
    %226 = vmatpush1.bf16.msra.mxu0 %v207
    %227 = vmatprep.subr.bf16.mxu0 0
    %228 = vmatpush1.bf16.msra.mxu0 %v206
    %229 = vmatprep.subr.bf16.mxu0 0
    %230 = vmatpush1.bf16.msra.mxu0 %v205
    %231 = vmatprep.subr.bf16.mxu0 0
    %232 = vmatpush1.bf16.msra.mxu0 %v204
    %233 = vmatprep.subr.bf16.mxu0 0
    %234 = vmatpush1.bf16.msra.mxu0 %v203
    %235 = vmatprep.subr.bf16.mxu0 0
    %236 = vmatpush2.bf16.msra.mxu0 0
    %237 = vmatprep.subr.bf16.mxu0 0
    %238 = vmatpush2.bf16.msra.mxu0 0
    %239 = vmatprep.subr.bf16.mxu0 0
    %240 = vmatpush2.bf16.msra.mxu0 0
    %241 = vmatprep.subr.bf16.mxu0 0
    %242 = vmatpush2.bf16.msra.mxu0 0
    %243 = vmatprep.subr.bf16.mxu0 0
    %244 = vmatpush2.bf16.msra.mxu0 0
    %245 = vmatprep.subr.bf16.mxu0 0
    %246 = vmatpush2.bf16.msra.mxu0 0
    %247 = vmatprep.subr.bf16.mxu0 0
    %248 = vmatpush2.bf16.msra.mxu0 0
    %249 = vmatprep.subr.bf16.mxu0 0
    %250 = vmatpush2.bf16.msra.mxu0 0
    %251 = vmatprep.mubr.bf16.mxu0 0
    %252 = vmatmul.mubr.bf16.gmra.mxu0 %v145
    %v253 = vpop.f32.mrf.mxu0
    %v254 = vadd.f32 %v169, %v253
    %v255 = vpop.f32.mrf.mxu0
    %v256 = vpop.f32.mrf.mxu0
    %v257 = vpop.f32.mrf.mxu0
    %258 = vdwg.mxu0
    %v259 = vmax.f32 %v254, 0.0
    %v260 = vpack.c.bf16 %v259, %v259
    %s261 = scalar_lea.vmem [#allocation2], 128
    %v262 = vld [vmem:[%s261] sm:$0xf]
    %v263 = vld [vmem:[%s261 + $0x4] sm:$0xf]
    %v264 = vld [vmem:[%s261 + $0x8] sm:$0xf]
    %v265 = vld [vmem:[%s261 + $0xc] sm:$0xf]
    %v266 = vld [vmem:[%s261 + $0x10] sm:$0xf]
    %v267 = vld [vmem:[%s261 + $0x14] sm:$0xf]
    %v268 = vld [vmem:[%s261 + $0x18] sm:$0xf]
    %v269 = vld [vmem:[%s261 + $0x1c] sm:$0xf]
    %v270 = vld [vmem:[%s261 + $0x20] sm:$0xf]
    %v271 = vld [vmem:[%s261 + $0x24] sm:$0xf]
    %v272 = vld [vmem:[%s261 + $0x28] sm:$0xf]
    %v273 = vld [vmem:[%s261 + $0x2c] sm:$0xf]
    %v274 = vld [vmem:[%s261 + $0x30] sm:$0xf]
    %v275 = vld [vmem:[%s261 + $0x34] sm:$0xf]
    %v276 = vld [vmem:[%s261 + $0x38] sm:$0xf]
    %v277 = vld [vmem:[%s261 + $0x3c] sm:$0xf]
    %s278 = scalar_lea.vmem %s2, 2
    %v279 = vld [vmem:[%s278] sm:$0x1]
    %v281 = vlaneseq
    %v282 = vshrl.u32 %v281, 7
    %v283 = vsub.s32 0, %v282
    %v284 = vrot.slane %v279, %v283
    %v302 = vunpack.c.l.b16 %v262
    %v303 = vunpack.c.l.b16 %v263
    %v304 = vunpack.c.l.b16 %v264
    %v305 = vunpack.c.l.b16 %v265
    %v306 = vunpack.c.l.b16 %v266
    %v307 = vunpack.c.l.b16 %v267
    %v308 = vunpack.c.l.b16 %v268
    %v309 = vunpack.c.l.b16 %v269
    %v310 = vunpack.c.l.b16 %v270
    %v311 = vunpack.c.l.b16 %v271
    %v312 = vunpack.c.l.b16 %v272
    %v313 = vunpack.c.l.b16 %v273
    %v314 = vunpack.c.l.b16 %v274
    %v315 = vunpack.c.l.b16 %v275
    %v316 = vunpack.c.l.b16 %v276
    %v317 = vunpack.c.l.b16 %v277
    %v318 = vpack.c.b16 %v303, %v302
    %v319 = vpack.c.b16 %v305, %v304
    %v320 = vpack.c.b16 %v307, %v306
    %v321 = vpack.c.b16 %v309, %v308
    %v322 = vpack.c.b16 %v311, %v310
    %v323 = vpack.c.b16 %v313, %v312
    %v324 = vpack.c.b16 %v315, %v314
    %v325 = vpack.c.b16 %v317, %v316
    %334 = vmatprep.subr.bf16.mxu0 0
    %335 = vmatpush1.bf16.msra.mxu0 %v325
    %336 = vmatprep.subr.bf16.mxu0 0
    %337 = vmatpush1.bf16.msra.mxu0 %v324
    %338 = vmatprep.subr.bf16.mxu0 0
    %339 = vmatpush1.bf16.msra.mxu0 %v323
    %340 = vmatprep.subr.bf16.mxu0 0
    %341 = vmatpush1.bf16.msra.mxu0 %v322
    %342 = vmatprep.subr.bf16.mxu0 0
    %343 = vmatpush1.bf16.msra.mxu0 %v321
    %344 = vmatprep.subr.bf16.mxu0 0
    %345 = vmatpush1.bf16.msra.mxu0 %v320
    %346 = vmatprep.subr.bf16.mxu0 0
    %347 = vmatpush1.bf16.msra.mxu0 %v319
    %348 = vmatprep.subr.bf16.mxu0 0
    %349 = vmatpush1.bf16.msra.mxu0 %v318
    %350 = vmatprep.subr.bf16.mxu0 0
    %351 = vmatpush2.bf16.msra.mxu0 0
    %352 = vmatprep.subr.bf16.mxu0 0
    %353 = vmatpush2.bf16.msra.mxu0 0
    %354 = vmatprep.subr.bf16.mxu0 0
    %355 = vmatpush2.bf16.msra.mxu0 0
    %356 = vmatprep.subr.bf16.mxu0 0
    %357 = vmatpush2.bf16.msra.mxu0 0
    %358 = vmatprep.subr.bf16.mxu0 0
    %359 = vmatpush2.bf16.msra.mxu0 0
    %360 = vmatprep.subr.bf16.mxu0 0
    %361 = vmatpush2.bf16.msra.mxu0 0
    %362 = vmatprep.subr.bf16.mxu0 0
    %363 = vmatpush2.bf16.msra.mxu0 0
    %364 = vmatprep.subr.bf16.mxu0 0
    %365 = vmatpush2.bf16.msra.mxu0 0
    %366 = vmatprep.mubr.bf16.mxu0 0
    %367 = vmatmul.mubr.bf16.gmra.mxu0 %v260
    %v368 = vpop.f32.mrf.mxu0
    %v369 = vadd.f32 %v284, %v368
    %v370 = vpop.f32.mrf.mxu0
    %v371 = vpop.f32.mrf.mxu0
    %v372 = vpop.f32.mrf.mxu0
    %373 = vdwg.mxu0
    %374 = vst [vmem:[#allocation5] sm:$0xff] %v369
    // Predicated region
    $region18: #{_linstack_forward.1} parent=1 // pred_check
      _
    $region19: #{_linstack_forward.1} parent=1 // pred_check_branch
      %376 = sbr.rel (0) target = $region21
    $region20: #{_linstack_forward.1} parent=1 // pred_region
      %s378 = ssub.s32 128, 128
      %379 = vsyncadd [#allocation4], %s378
      %s381 = sshll.u32 [#allocation5], 4
      %s382 = int_to_ptr.vmem [resolvable:$true] %s381
      %384 = dma.vmem_to_hbm [thread:$0]  %s382, 128, %s3, [#allocation4]
    $region21: #{_linstack_forward.1} parent=1 // pred_fallthru
      _
    // Predicated region
    $region22: #{_linstack_forward.1} parent=1 // pred_check
      _
    $region23: #{_linstack_forward.1} parent=1 // pred_check_branch
      %386 = sbr.rel (0) target = $region25
    $region24: #{_linstack_forward.1} parent=1 // pred_region
      %387 = dma.done [#allocation4], 128
    $region25: #{_linstack_forward.1} parent=1 // pred_fallthru
      _
    %388 = vsyncpa [#allocation3], 1
    %389 = vsyncpa [#allocation4], 1

</llo_original>
